<compile_context>
chip_gen: v7x
topology: tpu7x:2x2x1
jax: 0.10.0
libtpu: 0.0.40
codegen_flags: <defaults>
</compile_context>

<pallas_src>
import jax
import jax.numpy as jnp
from jax.experimental import pallas as pl
from jax.experimental.pallas import tpu as pltpu


# ----------------------------- Pallas kernel --------------------------------

def _mlp_t_kernel(xt_ref, wat_ref, w2t_ref, w3t_ref, b1_ref, b2_ref, b3_ref,
                  out_ref):
    xt = xt_ref[...]                                                    # (8,  bb)

    # fused [embedding ; other-features] -> Linear(18, 64), then ReLU
    h1 = jnp.dot(wat_ref[...], xt, preferred_element_type=jnp.float32)  # (64, bb)
    h1 = jnp.maximum(h1 + b1_ref[...], 0.0)                             # + (64,1)

    # Linear(64, 32) + ReLU   (Dropout -> identity at inference)
    h2 = jnp.dot(w2t_ref[...], h1, preferred_element_type=jnp.float32)  # (32, bb)
    h2 = jnp.maximum(h2 + b2_ref[...], 0.0)                             # + (32,1)

    # Linear(32, 1)  -> lane-dense (1, bb) output row
    y = jnp.dot(w3t_ref[...], h2, preferred_element_type=jnp.float32)   # (1,  bb)
    out_ref[...] = y + b3_ref[...]                                      # + (1,1)


# ------------------------------- wrapper -------------------------------------

def _round_up(n, m):
    return ((n + m - 1) // m) * m


def prepare_params(params, num_models):
    """One-time parameter preparation (fusion + transpose + tiny pad)."""
    we = params["we"].astype(jnp.float32)    # (num_models, 16)
    be = params["be"].astype(jnp.float32)    # (16,)
    w1 = params["w1"].astype(jnp.float32)    # (18, 64)
    b1 = params["b1"].astype(jnp.float32)    # (64,)
    w2 = params["w2"].astype(jnp.float32)    # (64, 32)
    b2 = params["b2"].astype(jnp.float32)    # (32,)
    w3 = params["w3"].astype(jnp.float32)    # (32, 1)
    b3 = params["b3"].astype(jnp.float32)    # (1,)

    f_in = num_models + 2
    kp = _round_up(f_in, 8)                  # contraction dim -> one sublane tile

    # Exact algebraic fusion of the embedding Linear into the first main Linear.
    w_fused = jnp.concatenate([we @ w1[:16, :], w1[16:18, :]], axis=0)   # (f_in, 64)
    b_fused = be @ w1[:16, :] + b1                                       # (64,)

    # Store weights transposed (output-major) for the batch-on-lanes kernel;
    # zero-pad the fused contraction dim f_in -> kp (exact).
    wat = jnp.zeros((64, kp), jnp.float32).at[:, :f_in].set(w_fused.T)   # (64, kp)
    w2t = w2.T                                                           # (32, 64)
    w3t = w3.T                                                           # (1, 32)

    return {"wat": wat, "w2t": w2t, "w3t": w3t,
            "b1": b_fused.reshape(64, 1), "b2": b2.reshape(32, 1),
            "b3": b3.reshape(1, 1), "f_in": f_in, "kp": kp}


def communication_predictor_forward_features_major(xt, prepared, *, block_b=16384):
    """xt: (kp, B) float32, features-major (rows f_in..kp-1 are zero).
    Returns yT of shape (1, B) float32."""
    kp, B = xt.shape
    assert kp == prepared["kp"]

    if B <= block_b:
        bb = B                                   # single block: any B is legal
    else:
        bb = max(128, (block_b // 128) * 128)    # tiled blocks: multiple of 128
    grid = (pl.cdiv(B, bb),)                     # ragged final block is fine

    return pl.pallas_call(
        _mlp_t_kernel,
        out_shape=jax.ShapeDtypeStruct((1, B), jnp.float32),
        grid=grid,
        in_specs=[
            pl.BlockSpec((kp, bb), lambda i: (0, i)),   # x tile (pipelined DMA)
            pl.BlockSpec((64, kp), lambda i: (0, 0)),   # fused W1^T (VMEM-resident)
            pl.BlockSpec((32, 64), lambda i: (0, 0)),   # W2^T       (VMEM-resident)
            pl.BlockSpec((1, 32), lambda i: (0, 0)),    # W3^T       (VMEM-resident)
            pl.BlockSpec((64, 1), lambda i: (0, 0)),    # fused b1
            pl.BlockSpec((32, 1), lambda i: (0, 0)),    # b2
            pl.BlockSpec((1, 1), lambda i: (0, 0)),     # b3
        ],
        out_specs=pl.BlockSpec((1, bb), lambda i: (0, i)),   # lane-dense output
        compiler_params=pltpu.CompilerParams(
            dimension_semantics=("parallel",),
            vmem_limit_bytes=32 * 1024 * 1024),
    )(xt, prepared["wat"], prepared["w2t"], prepared["w3t"],
      prepared["b1"], prepared["b2"], prepared["b3"])


def communication_predictor_forward(x, prepared, *, block_b=16384):
    """x: (B, num_models + 2) float32.  Returns (B, 1) float32."""
    B = x.shape[0]
    f_in, kp = prepared["f_in"], prepared["kp"]
    assert x.shape[1] == f_in

    # Layout plumbing (cheap relative to the kernel): present x features-major
    # with the feature dim zero-padded to one full sublane tile.  Producers that
    # already hold x as (kp, B) can call the features-major entry point directly.
    xt = jnp.zeros((kp, B), jnp.float32).at[:f_in, :].set(
        jnp.asarray(x, jnp.float32).T)

    yt = communication_predictor_forward_features_major(xt, prepared,
                                                        block_b=block_b)
    return yt.reshape(B, 1)


# ------------------------------ reference ------------------------------------

def _reference_forward(x, params, num_models):
    mf = x[:, :num_models]
    of = x[:, num_models:]
    emb = mf @ params["we"] + params["be"]
    combined = jnp.concatenate([emb, of], axis=1)
    h1 = jnp.maximum(combined @ params["w1"] + params["b1"], 0.0)
    h2 = jnp.maximum(h1 @ params["w2"] + params["b2"], 0.0)
    return h2 @ params["w3"] + params["b3"]


# --------------------------------- main ---------------------------------------

if __name__ == "__main__":
    num_models = 4

    key = jax.random.PRNGKey(0)
    ks = jax.random.split(key, 10)

    # Parameters stored as (in, out) so that y = x @ W + b (i.e. W = torch_weight.T).
    params = {
        "we": jax.random.normal(ks[0], (num_models, 16), jnp.float32) * 0.2,
        "be": jax.random.normal(ks[1], (16,), jnp.float32) * 0.1,
        "w1": jax.random.normal(ks[2], (18, 64), jnp.float32) * 0.2,
        "b1": jax.random.normal(ks[3], (64,), jnp.float32) * 0.1,
        "w2": jax.random.normal(ks[4], (64, 32), jnp.float32) * 0.2,
        "b2": jax.random.normal(ks[5], (32,), jnp.float32) * 0.1,
        "w3": jax.random.normal(ks[6], (32, 1), jnp.float32) * 0.2,
        "b3": jax.random.normal(ks[7], (1,), jnp.float32) * 0.1,
    }

    # One-time parameter fusion / transpose (hoisted out of the per-call path).
    prepared = prepare_params(params, num_models)

    # Small test: batch = 2, features = num_models + 2 = 6 (single block, bb == B).
    B = 2
    x = jax.random.normal(ks[8], (B, num_models + 2), jnp.float32)
    y = jax.block_until_ready(communication_predictor_forward(x, prepared))
    y_ref = _reference_forward(x, params, num_models)
    assert y.shape == (B, 1)
    assert jnp.allclose(y, y_ref, atol=1e-3, rtol=1e-3), (y, y_ref)

    # Multi-step grid with a ragged final block (128, 128, 44 rows) to exercise
    # the pipelined batch tiling + parallel batch axis at small shapes.
    B2 = 300
    x2 = jax.random.normal(ks[9], (B2, num_models + 2), jnp.float32)
    y2 = jax.block_until_ready(
        communication_predictor_forward(x2, prepared, block_b=128))
    y2_ref = _reference_forward(x2, params, num_models)
    assert y2.shape == (B2, 1)
    assert jnp.allclose(y2, y2_ref, atol=1e-3, rtol=1e-3)

    print("KERNEL_OK")
</pallas_src>

<mosaic_0001>
module attributes {stable_mosaic.version = 11 : i64} {
  func.func @_mlp_t_kernel(%arg0: i32, %arg1: memref<8x2xf32, #tpu.memory_space<vmem>>, %arg2: memref<64x8xf32, #tpu.memory_space<vmem>>, %arg3: memref<32x64xf32, #tpu.memory_space<vmem>>, %arg4: memref<1x32xf32, #tpu.memory_space<vmem>>, %arg5: memref<64x1xf32, #tpu.memory_space<vmem>>, %arg6: memref<32x1xf32, #tpu.memory_space<vmem>>, %arg7: memref<1x1xf32, #tpu.memory_space<vmem>>, %arg8: memref<1x2xf32, #tpu.memory_space<vmem>>) attributes {dimension_semantics = [#tpu.dimension_semantics<parallel>], iteration_bounds = array<i64: 1>, scalar_prefetch = 0 : i64, scratch_operands = 0 : i64, tpu.core_type = #tpu.core_type<tc>, window_params = [{transform_indices = @transform_0, window_bounds = array<i64: 8, 2>}, {pipeline_mode = #tpu.pipeline_mode<synchronous>, transform_indices = @transform_1, window_bounds = array<i64: 64, 8>}, {pipeline_mode = #tpu.pipeline_mode<synchronous>, transform_indices = @transform_2, window_bounds = array<i64: 32, 64>}, {pipeline_mode = #tpu.pipeline_mode<synchronous>, transform_indices = @transform_3, window_bounds = array<i64: 1, 32>}, {pipeline_mode = #tpu.pipeline_mode<synchronous>, transform_indices = @transform_4, window_bounds = array<i64: 64, 1>}, {pipeline_mode = #tpu.pipeline_mode<synchronous>, transform_indices = @transform_5, window_bounds = array<i64: 32, 1>}, {pipeline_mode = #tpu.pipeline_mode<synchronous>, transform_indices = @transform_6, window_bounds = array<i64: 1, 1>}, {transform_indices = @transform_7, window_bounds = array<i64: 1, 2>}]} {
    %c0 = arith.constant 0 : index
    %c0_0 = arith.constant 0 : index
    %0 = vector.load %arg1[%c0, %c0_0] : memref<8x2xf32, #tpu.memory_space<vmem>>, vector<8x2xf32>
    %c0_1 = arith.constant 0 : index
    %c0_2 = arith.constant 0 : index
    %1 = vector.load %arg2[%c0_1, %c0_2] : memref<64x8xf32, #tpu.memory_space<vmem>>, vector<64x8xf32>
    %cst = arith.constant dense<0.000000e+00> : vector<64x2xf32>
    %2 = tpu.matmul %1, %0, %cst {dimension_numbers = #tpu.dot_dimension_numbers<[1], [0], [0], [1], [0, 0, 1, 1], [], []>} : vector<64x8xf32>, vector<8x2xf32>, vector<64x2xf32> -> vector<64x2xf32>
    %c0_3 = arith.constant 0 : index
    %c0_4 = arith.constant 0 : index
    %3 = vector.load %arg5[%c0_3, %c0_4] : memref<64x1xf32, #tpu.memory_space<vmem>>, vector<64x1xf32>
    %4 = vector.broadcast %3 : vector<64x1xf32> to vector<64x2xf32>
    %5 = arith.addf %2, %4 : vector<64x2xf32>
    %cst_5 = arith.constant 0.000000e+00 : f32
    %6 = vector.broadcast %cst_5 : f32 to vector<64x2xf32>
    %7 = arith.maximumf %5, %6 : vector<64x2xf32>
    %c0_6 = arith.constant 0 : index
    %c0_7 = arith.constant 0 : index
    %8 = vector.load %arg3[%c0_6, %c0_7] : memref<32x64xf32, #tpu.memory_space<vmem>>, vector<32x64xf32>
    %cst_8 = arith.constant dense<0.000000e+00> : vector<32x2xf32>
    %9 = tpu.matmul %8, %7, %cst_8 {dimension_numbers = #tpu.dot_dimension_numbers<[1], [0], [0], [1], [0, 0, 1, 1], [], []>} : vector<32x64xf32>, vector<64x2xf32>, vector<32x2xf32> -> vector<32x2xf32>
    %c0_9 = arith.constant 0 : index
    %c0_10 = arith.constant 0 : index
    %10 = vector.load %arg6[%c0_9, %c0_10] : memref<32x1xf32, #tpu.memory_space<vmem>>, vector<32x1xf32>
    %11 = vector.broadcast %10 : vector<32x1xf32> to vector<32x2xf32>
    %12 = arith.addf %9, %11 : vector<32x2xf32>
    %cst_11 = arith.constant 0.000000e+00 : f32
    %13 = vector.broadcast %cst_11 : f32 to vector<32x2xf32>
    %14 = arith.maximumf %12, %13 : vector<32x2xf32>
    %c0_12 = arith.constant 0 : index
    %c0_13 = arith.constant 0 : index
    %15 = vector.load %arg4[%c0_12, %c0_13] : memref<1x32xf32, #tpu.memory_space<vmem>>, vector<1x32xf32>
    %cst_14 = arith.constant dense<0.000000e+00> : vector<1x2xf32>
    %16 = tpu.matmul %15, %14, %cst_14 {dimension_numbers = #tpu.dot_dimension_numbers<[1], [0], [0], [1], [0, 0, 1, 1], [], []>} : vector<1x32xf32>, vector<32x2xf32>, vector<1x2xf32> -> vector<1x2xf32>
    %c0_15 = arith.constant 0 : index
    %c0_16 = arith.constant 0 : index
    %17 = vector.load %arg7[%c0_15, %c0_16] : memref<1x1xf32, #tpu.memory_space<vmem>>, vector<1x1xf32>
    %18 = vector.broadcast %17 : vector<1x1xf32> to vector<1x2xf32>
    %19 = arith.addf %16, %18 : vector<1x2xf32>
    %c0_17 = arith.constant 0 : index
    %c0_18 = arith.constant 0 : index
    %20 = vector.load %arg8[%c0_17, %c0_18] : memref<1x2xf32, #tpu.memory_space<vmem>>, vector<1x2xf32>
    tpu.vector_store %arg8[%c0_17, %c0_18], %19 {strides = array<i32>} : memref<1x2xf32, #tpu.memory_space<vmem>>, vector<1x2xf32>,
    return
  }
  func.func @transform_0(%arg0: i32) -> (i32, i32) {
    %c0_i32 = arith.constant 0 : i32
    %c0_i32_0 = arith.constant 0 : i32
    return %c0_i32, %arg0 : i32, i32
  }
  func.func @transform_1(%arg0: i32) -> (i32, i32) {
    %c0_i32 = arith.constant 0 : i32
    %c0_i32_0 = arith.constant 0 : i32
    %c0_i32_1 = arith.constant 0 : i32
    return %c0_i32, %c0_i32_0 : i32, i32
  }
  func.func @transform_2(%arg0: i32) -> (i32, i32) {
    %c0_i32 = arith.constant 0 : i32
    %c0_i32_0 = arith.constant 0 : i32
    %c0_i32_1 = arith.constant 0 : i32
    return %c0_i32, %c0_i32_0 : i32, i32
  }
  func.func @transform_3(%arg0: i32) -> (i32, i32) {
    %c0_i32 = arith.constant 0 : i32
    %c0_i32_0 = arith.constant 0 : i32
    %c0_i32_1 = arith.constant 0 : i32
    return %c0_i32, %c0_i32_0 : i32, i32
  }
  func.func @transform_4(%arg0: i32) -> (i32, i32) {
    %c0_i32 = arith.constant 0 : i32
    %c0_i32_0 = arith.constant 0 : i32
    %c0_i32_1 = arith.constant 0 : i32
    return %c0_i32, %c0_i32_0 : i32, i32
  }
  func.func @transform_5(%arg0: i32) -> (i32, i32) {
    %c0_i32 = arith.constant 0 : i32
    %c0_i32_0 = arith.constant 0 : i32
    %c0_i32_1 = arith.constant 0 : i32
    return %c0_i32, %c0_i32_0 : i32, i32
  }
  func.func @transform_6(%arg0: i32) -> (i32, i32) {
    %c0_i32 = arith.constant 0 : i32
    %c0_i32_0 = arith.constant 0 : i32
    %c0_i32_1 = arith.constant 0 : i32
    return %c0_i32, %c0_i32_0 : i32, i32
  }
  func.func @transform_7(%arg0: i32) -> (i32, i32) {
    %c0_i32 = arith.constant 0 : i32
    %c0_i32_0 = arith.constant 0 : i32
    return %c0_i32, %arg0 : i32, i32
  }
}

</mosaic_0001>

<llo_original>
// kernel: tpu_custom_call.1
$region0: #{tpu_custom_call.1}
  #allocation0 [shape = 'u32[]', space=smem, size = 0x4, offset = 0x4, fixed_abs, tag = 'smem constant byte address 0x4 - core index']
  #allocation1 [shape = 'u32[144,128]{1,0:T(1,128)}', space=vmem, size = 0x12000, scoped, tag = 'internal scratch']
  #allocation2 [shape = 'f32[1,1]{1,0:T(1,128)S(1)}', space=vmem, size = 0x200, scoped, tag = 'scoped memory for tpu_custom_call.1']
  %s0 = inlined_call_operand.vmem [shape: f32[8,2], index: 0, kind: input, shape index: {}]
  %s1 = inlined_call_operand.vmem [shape: f32[64,8], index: 1, kind: input, shape index: {}]
  %s2 = inlined_call_operand.vmem [shape: f32[32,64], index: 2, kind: input, shape index: {}]
  %s3 = inlined_call_operand.vmem [shape: f32[1,32], index: 3, kind: input, shape index: {}]
  %s4 = inlined_call_operand.vmem [shape: f32[64,1], index: 4, kind: input, shape index: {}]
  %s5 = inlined_call_operand.vmem [shape: f32[32,1], index: 5, kind: input, shape index: {}]
  %s6 = inlined_call_operand.<no memory space> [shape: f32[1,1], index: 6, kind: input, shape index: {}]
  %s7 = inlined_call_operand.hbm [shape: f32[1,2], index: 7, kind: output, shape index: {}]
  %s8 = sld [smem:[#allocation0]]
  $region38: #{tpu_custom_call.1} parent=0
    _
  %s10 = ssub.s32 1, %s8
  %s11 = scalar_select 0, %s10, %s8
  %v12 = vstv %s6
  %13 = vst [vmem:[#allocation2] sm:$0x1] %v12
  $region1: #{tpu_custom_call.1} parent=0
    #allocation3 [shape = 'u8[512]{0}', space=vmem, size = 0x400, scoped, tag = 'output window, operand 0, single buffered']
    #allocation4 [shape = 's32[1]{0}', space=sflag, size = 0x4, scoped, tag = 'scoped memory for tpu_custom_call.1']
    %14 = vsyncpa [#allocation4], 0
    // Predicated region
    $region2: #{tpu_custom_call.1} parent=1 // pred_check
      _
    $region3: #{tpu_custom_call.1} parent=1 // pred_check_branch
      %16 = sbr.rel (0) target = $region5
    $region4: #{tpu_custom_call.1} parent=1 // pred_region
      _
    $region5: #{tpu_custom_call.1} parent=1 // pred_fallthru
      _
    // Predicated region
    $region6: #{tpu_custom_call.1} parent=1 // pred_check
      _
    $region7: #{tpu_custom_call.1} parent=1 // pred_check_branch
      %18 = sbr.rel (0) target = $region9
    $region8: #{tpu_custom_call.1} parent=1 // pred_region
      _
    $region9: #{tpu_custom_call.1} parent=1 // pred_fallthru
      _
    // Predicated region
    $region10: #{tpu_custom_call.1} parent=1 // pred_check
      _
    $region11: #{tpu_custom_call.1} parent=1 // pred_check_branch
      %20 = sbr.rel (0) target = $region13
    $region12: #{tpu_custom_call.1} parent=1 // pred_region
      _
    $region13: #{tpu_custom_call.1} parent=1 // pred_fallthru
      _
    // Predicated region
    $region14: #{tpu_custom_call.1} parent=1 // pred_check
      _
    $region15: #{tpu_custom_call.1} parent=1 // pred_check_branch
      %22 = sbr.rel (0) target = $region17
    $region16: #{tpu_custom_call.1} parent=1 // pred_region
      _
    $region17: #{tpu_custom_call.1} parent=1 // pred_fallthru
      _
    // Predicated region
    $region18: #{tpu_custom_call.1} parent=1 // pred_check
      _
    $region19: #{tpu_custom_call.1} parent=1 // pred_check_branch
      %24 = sbr.rel (0) target = $region21
    $region20: #{tpu_custom_call.1} parent=1 // pred_region
      _
    $region21: #{tpu_custom_call.1} parent=1 // pred_fallthru
      _
    // Predicated region
    $region22: #{tpu_custom_call.1} parent=1 // pred_check
      _
    $region23: #{tpu_custom_call.1} parent=1 // pred_check_branch
      %26 = sbr.rel (0) target = $region25
    $region24: #{tpu_custom_call.1} parent=1 // pred_region
      _
    $region25: #{tpu_custom_call.1} parent=1 // pred_fallthru
      _
    // Predicated region
    $region26: #{tpu_custom_call.1} parent=1 // pred_check
      _
    $region27: #{tpu_custom_call.1} parent=1 // pred_check_branch
      %28 = sbr.rel (0) target = $region29
    $region28: #{tpu_custom_call.1} parent=1 // pred_region
      _
    $region29: #{tpu_custom_call.1} parent=1 // pred_fallthru
      _
    %v29 = vld [vmem:[%s0] sm:$0xff]
    %v30 = vld [vmem:[%s1] sm:$0xff]
    %v31 = vld [vmem:[%s1 + $0x8] sm:$0xff]
    %v32 = vld [vmem:[%s1 + $0x10] sm:$0xff]
    %v33 = vld [vmem:[%s1 + $0x18] sm:$0xff]
    %v34 = vld [vmem:[%s1 + $0x20] sm:$0xff]
    %v35 = vld [vmem:[%s1 + $0x28] sm:$0xff]
    %v36 = vld [vmem:[%s1 + $0x30] sm:$0xff]
    %v37 = vld [vmem:[%s1 + $0x38] sm:$0xff]
    %v38 = vld [vmem:[%s4] sm:$0xff]
    %v39 = vld [vmem:[%s4 + $0x8] sm:$0xff]
    %v40 = vld [vmem:[%s4 + $0x10] sm:$0xff]
    %v41 = vld [vmem:[%s4 + $0x18] sm:$0xff]
    %v42 = vld [vmem:[%s4 + $0x20] sm:$0xff]
    %v43 = vld [vmem:[%s4 + $0x28] sm:$0xff]
    %v44 = vld [vmem:[%s4 + $0x30] sm:$0xff]
    %v45 = vld [vmem:[%s4 + $0x38] sm:$0xff]
    %47 = vset.pattern.permute.xlu0 0
    %48 = vperm.xlu0 %47, %v38
    %v49 = vpop.permute.xlu0 %48
    %52 = vset.pattern.permute.xlu0 0
    %53 = vperm.xlu0 %52, %v39
    %v54 = vpop.permute.xlu0 %53
    %57 = vset.pattern.permute.xlu0 0
    %58 = vperm.xlu0 %57, %v40
    %v59 = vpop.permute.xlu0 %58
    %62 = vset.pattern.permute.xlu0 0
    %63 = vperm.xlu0 %62, %v41
    %v64 = vpop.permute.xlu0 %63
    %67 = vset.pattern.permute.xlu0 0
    %68 = vperm.xlu0 %67, %v42
    %v69 = vpop.permute.xlu0 %68
    %72 = vset.pattern.permute.xlu0 0
    %73 = vperm.xlu0 %72, %v43
    %v74 = vpop.permute.xlu0 %73
    %77 = vset.pattern.permute.xlu0 0
    %78 = vperm.xlu0 %77, %v44
    %v79 = vpop.permute.xlu0 %78
    %82 = vset.pattern.permute.xlu0 0
    %83 = vperm.xlu0 %82, %v45
    %v84 = vpop.permute.xlu0 %83
    %vm86 = vcmask 64512
    %v88 = vsel %vm86, %v30, 0
    %v91 = vsel %vm86, %v31, 0
    %v94 = vsel %vm86, %v32, 0
    %v97 = vsel %vm86, %v33, 0
    %v100 = vsel %vm86, %v34, 0
    %v103 = vsel %vm86, %v35, 0
    %v106 = vsel %vm86, %v36, 0
    %v109 = vsel %vm86, %v37, 0
    %111 = vmatprep.subr.mxu0 0.0
    %112 = vmatpush1.msra.mxu0 %v29
    %113 = vmatprep.subr.mxu0 0.0
    %114 = vmatpush1.msra.mxu0 0.0
    %115 = vmatprep.subr.mxu0 0.0
    %116 = vmatpush1.msra.mxu0 0.0
    %117 = vmatprep.subr.mxu0 0.0
    %118 = vmatpush1.msra.mxu0 0.0
    %119 = vmatprep.subr.mxu0 0.0
    %120 = vmatpush1.msra.mxu0 0.0
    %121 = vmatprep.subr.mxu0 0.0
    %122 = vmatpush1.msra.mxu0 0.0
    %123 = vmatprep.subr.mxu0 0.0
    %124 = vmatpush1.msra.mxu0 0.0
    %125 = vmatprep.subr.mxu0 0.0
    %126 = vmatpush1.msra.mxu0 0.0
    %127 = vmatprep.subr.mxu0 0.0
    %128 = vmatpush1.msra.mxu0 0.0
    %129 = vmatprep.subr.mxu0 0.0
    %130 = vmatpush1.msra.mxu0 0.0
    %131 = vmatprep.subr.mxu0 0.0
    %132 = vmatpush1.msra.mxu0 0.0
    %133 = vmatprep.subr.mxu0 0.0
    %134 = vmatpush1.msra.mxu0 0.0
    %135 = vmatprep.subr.mxu0 0.0
    %136 = vmatpush1.msra.mxu0 0.0
    %137 = vmatprep.subr.mxu0 0.0
    %138 = vmatpush1.msra.mxu0 0.0
    %139 = vmatprep.subr.mxu0 0.0
    %140 = vmatpush1.msra.mxu0 0.0
    %141 = vmatprep.subr.mxu0 0.0
    %142 = vmatpush1.msra.mxu0 0.0
    %143 = vmatprep.subr.mxu0 0.0
    %144 = vmatpush1.msra.mxu0 0.0
    %145 = vmatprep.subr.mxu0 0.0
    %146 = vmatpush1.msra.mxu0 0.0
    %147 = vmatprep.subr.mxu0 0.0
    %148 = vmatpush1.msra.mxu0 0.0
    %149 = vmatprep.subr.mxu0 0.0
    %150 = vmatpush1.msra.mxu0 0.0
    %151 = vmatprep.subr.mxu0 0.0
    %152 = vmatpush1.msra.mxu0 0.0
    %153 = vmatprep.subr.mxu0 0.0
    %154 = vmatpush1.msra.mxu0 0.0
    %155 = vmatprep.subr.mxu0 0.0
    %156 = vmatpush1.msra.mxu0 0.0
    %157 = vmatprep.subr.mxu0 0.0
    %158 = vmatpush1.msra.mxu0 0.0
    %159 = vmatprep.subr.mxu0 0.0
    %160 = vmatpush1.msra.mxu0 0.0
    %161 = vmatprep.subr.mxu0 0.0
    %162 = vmatpush1.msra.mxu0 0.0
    %163 = vmatprep.subr.mxu0 0.0
    %164 = vmatpush1.msra.mxu0 0.0
    %165 = vmatprep.subr.mxu0 0.0
    %166 = vmatpush1.msra.mxu0 0.0
    %167 = vmatprep.subr.mxu0 0.0
    %168 = vmatpush1.msra.mxu0 0.0
    %169 = vmatprep.subr.mxu0 0.0
    %170 = vmatpush1.msra.mxu0 0.0
    %171 = vmatprep.subr.mxu0 0.0
    %172 = vmatpush1.msra.mxu0 0.0
    %173 = vmatprep.subr.mxu0 0.0
    %174 = vmatpush1.msra.mxu0 0.0
    %175 = vmatprep.mubr.f32.mxu0 0.0
    %176 = vmatmul.mubr.f32.gmra.mrb[0].mxu0 %v88
    %v177 = vpop.f32.mrb[0].mxu0
    %v178 = vadd.f32 %v49, %v177
    %v179 = vpop.f32.mrb[0].mxu0
    %180 = vmatprep.mubr.f32.mxu0 0.0
    %181 = vmatmul.mubr.f32.gmra.mrb[0].mxu0 %v91
    %v182 = vpop.f32.mrb[0].mxu0
    %v183 = vadd.f32 %v54, %v182
    %v184 = vpop.f32.mrb[0].mxu0
    %185 = vmatprep.mubr.f32.mxu0 0.0
    %186 = vmatmul.mubr.f32.gmra.mrb[0].mxu0 %v94
    %v187 = vpop.f32.mrb[0].mxu0
    %v188 = vadd.f32 %v59, %v187
    %v189 = vpop.f32.mrb[0].mxu0
    %190 = vmatprep.mubr.f32.mxu0 0.0
    %191 = vmatmul.mubr.f32.gmra.mrb[0].mxu0 %v97
    %v192 = vpop.f32.mrb[0].mxu0
    %v193 = vadd.f32 %v64, %v192
    %v194 = vpop.f32.mrb[0].mxu0
    %195 = vmatprep.mubr.f32.mxu0 0.0
    %196 = vmatmul.mubr.f32.gmra.mrb[0].mxu0 %v100
    %v197 = vpop.f32.mrb[0].mxu0
    %v198 = vadd.f32 %v69, %v197
    %v199 = vpop.f32.mrb[0].mxu0
    %200 = vmatprep.mubr.f32.mxu0 0.0
    %201 = vmatmul.mubr.f32.gmra.mrb[0].mxu0 %v103
    %v202 = vpop.f32.mrb[0].mxu0
    %v203 = vadd.f32 %v74, %v202
    %v204 = vpop.f32.mrb[0].mxu0
    %205 = vmatprep.mubr.f32.mxu0 0.0
    %206 = vmatmul.mubr.f32.gmra.mrb[0].mxu0 %v106
    %v207 = vpop.f32.mrb[0].mxu0
    %v208 = vadd.f32 %v79, %v207
    %v209 = vpop.f32.mrb[0].mxu0
    %210 = vmatprep.mubr.f32.mxu0 0.0
    %211 = vmatmul.mubr.f32.gmra.mrb[0].mxu0 %v109
    %v212 = vpop.f32.mrb[0].mxu0
    %v213 = vadd.f32 %v84, %v212
    %v214 = vpop.f32.mrb[0].mxu0
    %215 = vdwg.mxu0
    %v216 = vmax.f32 %v178, 0.0
    %v217 = vmax.f32 %v183, 0.0
    %v218 = vmax.f32 %v188, 0.0
    %v219 = vmax.f32 %v193, 0.0
    %v220 = vmax.f32 %v198, 0.0
    %v221 = vmax.f32 %v203, 0.0
    %v222 = vmax.f32 %v208, 0.0
    %v223 = vmax.f32 %v213, 0.0
    %v224 = vld [vmem:[%s2] sm:$0xff]
    %v225 = vld [vmem:[%s2 + $0x8] sm:$0xff]
    %v226 = vld [vmem:[%s2 + $0x10] sm:$0xff]
    %v227 = vld [vmem:[%s2 + $0x18] sm:$0xff]
    %v228 = vld [vmem:[%s5] sm:$0xff]
    %v229 = vld [vmem:[%s5 + $0x8] sm:$0xff]
    %v230 = vld [vmem:[%s5 + $0x10] sm:$0xff]
    %v231 = vld [vmem:[%s5 + $0x18] sm:$0xff]
    %233 = vset.pattern.permute.xlu0 0
    %234 = vperm.xlu0 %233, %v228
    %v235 = vpop.permute.xlu0 %234
    %238 = vset.pattern.permute.xlu0 0
    %239 = vperm.xlu0 %238, %v229
    %v240 = vpop.permute.xlu0 %239
    %243 = vset.pattern.permute.xlu0 0
    %244 = vperm.xlu0 %243, %v230
    %v245 = vpop.permute.xlu0 %244
    %248 = vset.pattern.permute.xlu0 0
    %249 = vperm.xlu0 %248, %v231
    %v250 = vpop.permute.xlu0 %249
    %vm252 = vcmask 523264
    %v254 = vsel %vm252, %v224, 0
    %v257 = vsel %vm252, %v225, 0
    %v260 = vsel %vm252, %v226, 0
    %v263 = vsel %vm252, %v227, 0
    %265 = vmatprep.subr.mxu0 0.0
    %266 = vmatpush1.msra.mxu0 %v216
    %267 = vmatprep.subr.mxu0 0.0
    %268 = vmatpush1.msra.mxu0 %v217
    %269 = vmatprep.subr.mxu0 0.0
    %270 = vmatpush1.msra.mxu0 %v218
    %271 = vmatprep.subr.mxu0 0.0
    %272 = vmatpush1.msra.mxu0 %v219
    %273 = vmatprep.subr.mxu0 0.0
    %274 = vmatpush1.msra.mxu0 %v220
    %275 = vmatprep.subr.mxu0 0.0
    %276 = vmatpush1.msra.mxu0 %v221
    %277 = vmatprep.subr.mxu0 0.0
    %278 = vmatpush1.msra.mxu0 %v222
    %279 = vmatprep.subr.mxu0 0.0
    %280 = vmatpush1.msra.mxu0 %v223
    %281 = vmatprep.subr.mxu0 0.0
    %282 = vmatpush1.msra.mxu0 0.0
    %283 = vmatprep.subr.mxu0 0.0
    %284 = vmatpush1.msra.mxu0 0.0
    %285 = vmatprep.subr.mxu0 0.0
    %286 = vmatpush1.msra.mxu0 0.0
    %287 = vmatprep.subr.mxu0 0.0
    %288 = vmatpush1.msra.mxu0 0.0
    %289 = vmatprep.subr.mxu0 0.0
    %290 = vmatpush1.msra.mxu0 0.0
    %291 = vmatprep.subr.mxu0 0.0
    %292 = vmatpush1.msra.mxu0 0.0
    %293 = vmatprep.subr.mxu0 0.0
    %294 = vmatpush1.msra.mxu0 0.0
    %295 = vmatprep.subr.mxu0 0.0
    %296 = vmatpush1.msra.mxu0 0.0
    %297 = vmatprep.subr.mxu0 0.0
    %298 = vmatpush1.msra.mxu0 0.0
    %299 = vmatprep.subr.mxu0 0.0
    %300 = vmatpush1.msra.mxu0 0.0
    %301 = vmatprep.subr.mxu0 0.0
    %302 = vmatpush1.msra.mxu0 0.0
    %303 = vmatprep.subr.mxu0 0.0
    %304 = vmatpush1.msra.mxu0 0.0
    %305 = vmatprep.subr.mxu0 0.0
    %306 = vmatpush1.msra.mxu0 0.0
    %307 = vmatprep.subr.mxu0 0.0
    %308 = vmatpush1.msra.mxu0 0.0
    %309 = vmatprep.subr.mxu0 0.0
    %310 = vmatpush1.msra.mxu0 0.0
    %311 = vmatprep.subr.mxu0 0.0
    %312 = vmatpush1.msra.mxu0 0.0
    %313 = vmatprep.subr.mxu0 0.0
    %314 = vmatpush1.msra.mxu0 0.0
    %315 = vmatprep.subr.mxu0 0.0
    %316 = vmatpush1.msra.mxu0 0.0
    %317 = vmatprep.subr.mxu0 0.0
    %318 = vmatpush1.msra.mxu0 0.0
    %319 = vmatprep.subr.mxu0 0.0
    %320 = vmatpush1.msra.mxu0 0.0
    %321 = vmatprep.subr.mxu0 0.0
    %322 = vmatpush1.msra.mxu0 0.0
    %323 = vmatprep.subr.mxu0 0.0
    %324 = vmatpush1.msra.mxu0 0.0
    %325 = vmatprep.subr.mxu0 0.0
    %326 = vmatpush1.msra.mxu0 0.0
    %327 = vmatprep.subr.mxu0 0.0
    %328 = vmatpush1.msra.mxu0 0.0
    %329 = vmatprep.mubr.f32.mxu0 0.0
    %330 = vmatmul.mubr.f32.gmra.mrb[0].mxu0 %v254
    %v331 = vpop.f32.mrb[0].mxu0
    %v332 = vadd.f32 %v235, %v331
    %v333 = vpop.f32.mrb[0].mxu0
    %334 = vmatprep.mubr.f32.mxu0 0.0
    %335 = vmatmul.mubr.f32.gmra.mrb[0].mxu0 %v257
    %v336 = vpop.f32.mrb[0].mxu0
    %v337 = vadd.f32 %v240, %v336
    %v338 = vpop.f32.mrb[0].mxu0
    %339 = vmatprep.mubr.f32.mxu0 0.0
    %340 = vmatmul.mubr.f32.gmra.mrb[0].mxu0 %v260
    %v341 = vpop.f32.mrb[0].mxu0
    %v342 = vadd.f32 %v245, %v341
    %v343 = vpop.f32.mrb[0].mxu0
    %344 = vmatprep.mubr.f32.mxu0 0.0
    %345 = vmatmul.mubr.f32.gmra.mrb[0].mxu0 %v263
    %v346 = vpop.f32.mrb[0].mxu0
    %v347 = vadd.f32 %v250, %v346
    %v348 = vpop.f32.mrb[0].mxu0
    %349 = vdwg.mxu0
    %v350 = vmax.f32 %v332, 0.0
    %v351 = vmax.f32 %v337, 0.0
    %v352 = vmax.f32 %v342, 0.0
    %v353 = vmax.f32 %v347, 0.0
    %v354 = vld [vmem:[%s3] sm:$0x1]
    %v355 = vld [vmem:[#allocation2] sm:$0x1]
    %357 = vset.pattern.permute.xlu0 0
    %358 = vperm.xlu0 %357, %v355
    %v359 = vpop.permute.xlu0 %358
    %v361 = vlaneseq
    %v362 = vshrl.u32 %v361, 7
    %v363 = vsub.s32 0, %v362
    %v364 = vrot.slane %v359, %v363
    %vm365 = vcmask 261120
    %v367 = vsel %vm365, %v354, 0
    %369 = vmatprep.subr.mxu0 0.0
    %370 = vmatpush1.msra.mxu0 %v350
    %371 = vmatprep.subr.mxu0 0.0
    %372 = vmatpush1.msra.mxu0 %v351
    %373 = vmatprep.subr.mxu0 0.0
    %374 = vmatpush1.msra.mxu0 %v352
    %375 = vmatprep.subr.mxu0 0.0
    %376 = vmatpush1.msra.mxu0 %v353
    %377 = vmatprep.subr.mxu0 0.0
    %378 = vmatpush1.msra.mxu0 0.0
    %379 = vmatprep.subr.mxu0 0.0
    %380 = vmatpush1.msra.mxu0 0.0
    %381 = vmatprep.subr.mxu0 0.0
    %382 = vmatpush1.msra.mxu0 0.0
    %383 = vmatprep.subr.mxu0 0.0
    %384 = vmatpush1.msra.mxu0 0.0
    %385 = vmatprep.subr.mxu0 0.0
    %386 = vmatpush1.msra.mxu0 0.0
    %387 = vmatprep.subr.mxu0 0.0
    %388 = vmatpush1.msra.mxu0 0.0
    %389 = vmatprep.subr.mxu0 0.0
    %390 = vmatpush1.msra.mxu0 0.0
    %391 = vmatprep.subr.mxu0 0.0
    %392 = vmatpush1.msra.mxu0 0.0
    %393 = vmatprep.subr.mxu0 0.0
    %394 = vmatpush1.msra.mxu0 0.0
    %395 = vmatprep.subr.mxu0 0.0
    %396 = vmatpush1.msra.mxu0 0.0
    %397 = vmatprep.subr.mxu0 0.0
    %398 = vmatpush1.msra.mxu0 0.0
    %399 = vmatprep.subr.mxu0 0.0
    %400 = vmatpush1.msra.mxu0 0.0
    %401 = vmatprep.subr.mxu0 0.0
    %402 = vmatpush1.msra.mxu0 0.0
    %403 = vmatprep.subr.mxu0 0.0
    %404 = vmatpush1.msra.mxu0 0.0
    %405 = vmatprep.subr.mxu0 0.0
    %406 = vmatpush1.msra.mxu0 0.0
    %407 = vmatprep.subr.mxu0 0.0
    %408 = vmatpush1.msra.mxu0 0.0
    %409 = vmatprep.subr.mxu0 0.0
    %410 = vmatpush1.msra.mxu0 0.0
    %411 = vmatprep.subr.mxu0 0.0
    %412 = vmatpush1.msra.mxu0 0.0
    %413 = vmatprep.subr.mxu0 0.0
    %414 = vmatpush1.msra.mxu0 0.0
    %415 = vmatprep.subr.mxu0 0.0
    %416 = vmatpush1.msra.mxu0 0.0
    %417 = vmatprep.subr.mxu0 0.0
    %418 = vmatpush1.msra.mxu0 0.0
    %419 = vmatprep.subr.mxu0 0.0
    %420 = vmatpush1.msra.mxu0 0.0
    %421 = vmatprep.subr.mxu0 0.0
    %422 = vmatpush1.msra.mxu0 0.0
    %423 = vmatprep.subr.mxu0 0.0
    %424 = vmatpush1.msra.mxu0 0.0
    %425 = vmatprep.subr.mxu0 0.0
    %426 = vmatpush1.msra.mxu0 0.0
    %427 = vmatprep.subr.mxu0 0.0
    %428 = vmatpush1.msra.mxu0 0.0
    %429 = vmatprep.subr.mxu0 0.0
    %430 = vmatpush1.msra.mxu0 0.0
    %431 = vmatprep.subr.mxu0 0.0
    %432 = vmatpush1.msra.mxu0 0.0
    %433 = vmatprep.mubr.f32.mxu0 0.0
    %434 = vmatmul.mubr.f32.gmra.mrb[0].mxu0 %v367
    %v435 = vpop.f32.mrb[0].mxu0
    %v436 = vadd.f32 %v364, %v435
    %v437 = vpop.f32.mrb[0].mxu0
    %438 = vdwg.mxu0
    %vm439 = vcmask 8192
    %440 = vst.msk [vmem:[#allocation3] sm:$0x1] %vm439, %v436
    // Predicated region
    $region30: #{tpu_custom_call.1} parent=1 // pred_check
      _
    $region31: #{tpu_custom_call.1} parent=1 // pred_check_branch
      %442 = sbr.rel (0) target = $region33
    $region32: #{tpu_custom_call.1} parent=1 // pred_region
      %s444 = ssub.s32 16, 16
      %445 = vsyncadd [#allocation4], %s444
      %s447 = sshll.u32 [#allocation3], 4
      %s448 = int_to_ptr.vmem [resolvable:$true] %s447
      %450 = dma.vmem_to_hbm [thread:$0]  %s448, 16, %s7, [#allocation4]
    $region33: #{tpu_custom_call.1} parent=1 // pred_fallthru
      _
    // Predicated region
    $region34: #{tpu_custom_call.1} parent=1 // pred_check
      _
    $region35: #{tpu_custom_call.1} parent=1 // pred_check_branch
      %452 = sbr.rel (0) target = $region37
    $region36: #{tpu_custom_call.1} parent=1 // pred_region
      %453 = dma.done [#allocation4], 16
    $region37: #{tpu_custom_call.1} parent=1 // pred_fallthru
      _
    %454 = vsyncpa [#allocation4], 1

</llo_original>
